<compile_context>
chip_gen: v6e
topology: v6e:2x2x1
jax: 0.10.0
libtpu: 0.0.40
codegen_flags: <defaults>
</compile_context>

<pallas_src>
import functools

import jax
import jax.numpy as jnp
from jax.experimental import pallas as pl
from jax.experimental.pallas import tpu as pltpu


def _round_up(x, m):
    return ((x + m - 1) // m) * m


def _half_chord_kernel(x_ref, e_ref, out_ref, *, compute_dtype):
    """out[n, m] = clip(0.5 * || normalize(x[n]) - normalize(e[m]) ||_2, 0, 1)."""
    x = x_ref[...]  # (TM, D) f32
    e = e_ref[...]  # (TN, D) f32

    # F.normalize default eps = 1e-12:  x / max(||x||, eps) == x * rsqrt(max(sumsq, eps^2))
    eps_sq = jnp.float32(1e-24)
    x_hat = x * jax.lax.rsqrt(jnp.maximum(jnp.sum(x * x, axis=1, keepdims=True), eps_sq))
    e_hat = e * jax.lax.rsqrt(jnp.maximum(jnp.sum(e * e, axis=1, keepdims=True), eps_sq))

    # MXU: g[n, m] = <x_hat[n], e_hat[m]>  (contract D on both, f32 accumulate).
    g = jax.lax.dot_general(
        x_hat.astype(compute_dtype),
        e_hat.astype(compute_dtype),
        dimension_numbers=(((1,), (1,)), ((), ())),
        preferred_element_type=jnp.float32,
    )  # (TM, TN)

    # ||a - b||^2 = 2 - 2<a, b> for unit vectors; clamp rounding below zero.
    # Also fuse the /2 and the arcsin-domain clip here (VPU, hidden under MXU).
    dist = jnp.sqrt(jnp.maximum(2.0 - 2.0 * g, 0.0))
    out_ref[...] = jnp.clip(0.5 * dist, 0.0, 1.0)


def _pick_tiles(N, M, D_pad, tile_m, tile_n):
    """Shrink tiles until the double-buffered block working set fits VMEM."""
    tm = min(tile_m, _round_up(N, 8))
    tn = min(tile_n, _round_up(M, 128))
    # f32 bytes, double buffered inputs + output block.
    budget = 24 * 1024 * 1024
    def footprint(tm, tn):
        return 2 * 4 * (tm * D_pad + tn * D_pad + tm * tn)
    while footprint(tm, tn) > budget and (tm > 8 or tn > 128):
        if tm >= tn and tm > 8:
            tm = max(8, tm // 2)
        elif tn > 128:
            tn = max(128, tn // 2)
        else:
            break
    return tm, tn


def pairwise_half_chord(x, embed, *, compute_dtype=jnp.bfloat16,
                        tile_m=256, tile_n=256):
    """(N, M) clipped half chord distances between row-normalized x and embed."""
    N, D = x.shape
    M, D2 = embed.shape
    assert D == D2, "input and embed must share the feature dimension"

    x = x.astype(jnp.float32)
    embed = embed.astype(jnp.float32)

    # Pad D to a lane multiple (zero columns change neither norms nor dots).
    D_pad = _round_up(D, 128)
    tm, tn = _pick_tiles(N, M, D_pad, tile_m, tile_n)
    N_pad = _round_up(N, tm)
    M_pad = _round_up(M, tn)

    if (N_pad, D_pad) != (N, D):
        x = jnp.pad(x, ((0, N_pad - N), (0, D_pad - D)))
    if (M_pad, D_pad) != (M, D):
        embed = jnp.pad(embed, ((0, M_pad - M), (0, D_pad - D)))

    grid = (N_pad // tm, M_pad // tn)

    cost = pl.CostEstimate(
        flops=2 * N_pad * M_pad * D_pad + 4 * (N_pad + M_pad) * D_pad,
        transcendentals=N_pad + M_pad + N_pad * M_pad,  # rsqrt + sqrt
        bytes_accessed=4 * (N_pad * D_pad + M_pad * D_pad + N_pad * M_pad),
    )

    out = pl.pallas_call(
        functools.partial(_half_chord_kernel, compute_dtype=compute_dtype),
        out_shape=jax.ShapeDtypeStruct((N_pad, M_pad), jnp.float32),
        grid=grid,
        in_specs=[
            pl.BlockSpec((tm, D_pad), lambda i, j: (i, 0)),
            pl.BlockSpec((tn, D_pad), lambda i, j: (j, 0)),
        ],
        out_specs=pl.BlockSpec((tm, tn), lambda i, j: (i, j)),
        compiler_params=pltpu.CompilerParams(
            dimension_semantics=("parallel", "parallel"),
        ),
        cost_estimate=cost,
    )(x, embed)

    return out[:N, :M]


def prompt_forward(inp, embed, weight, stop, *, compute_dtype=jnp.bfloat16):
    """Full forward of Prompt. `stop` only affects the backward pass
    (ReplaceGrad.forward returns x_forward unchanged), so it is unused here."""
    del stop
    half = pairwise_half_chord(inp, embed, compute_dtype=compute_dtype)  # (N, M)
    d = 2.0 * jnp.square(jnp.arcsin(half))
    d = d * jnp.sign(weight)
    return jnp.abs(weight) * jnp.mean(d)  # scalar


def _reference_forward(inp, embed, weight):
    eps = 1e-12
    xn = inp / jnp.maximum(jnp.linalg.norm(inp, axis=1, keepdims=True), eps)
    en = embed / jnp.maximum(jnp.linalg.norm(embed, axis=1, keepdims=True), eps)
    dists = jnp.linalg.norm(xn[:, None, :] - en[None, :, :], axis=2)
    d = 2.0 * jnp.square(jnp.arcsin(jnp.clip(dists * 0.5, 0.0, 1.0))) * jnp.sign(weight)
    return jnp.abs(weight) * jnp.mean(d)


if __name__ == "__main__":
    key = jax.random.PRNGKey(0)
    k_in, k_emb = jax.random.split(key)

    N, M, D = 8, 4, 32   # small shapes: N "cutouts", M prompt embeddings, D feature dim
    inp = jax.random.normal(k_in, (N, D), dtype=jnp.float32)
    embed = jax.random.normal(k_emb, (M, D), dtype=jnp.float32)

    # Deterministic buffers, per the module's __init__ defaults.
    weight = jnp.asarray(1.0, dtype=jnp.float32)
    stop = jnp.asarray(-jnp.inf, dtype=jnp.float32)

    ref = jax.block_until_ready(_reference_forward(inp, embed, weight))

    # Exact-parity path: f32 operands on the MXU.
    out_f32 = jax.block_until_ready(
        prompt_forward(inp, embed, weight, stop, compute_dtype=jnp.float32))
    assert out_f32.shape == ()
    assert jnp.allclose(out_f32, ref, rtol=1e-4, atol=1e-5), (out_f32, ref)

    # Fast path: bf16 matmul operands with f32 accumulation (default).
    out_bf16 = jax.block_until_ready(
        prompt_forward(inp, embed, weight, stop, compute_dtype=jnp.bfloat16))
    assert out_bf16.shape == ()
    assert jnp.allclose(out_bf16, ref, rtol=1e-2, atol=2e-2), (out_bf16, ref)

    print("KERNEL_OK")
</pallas_src>

<mosaic_0001>
module attributes {stable_mosaic.version = 11 : i64} {
  func.func @_half_chord_kernel(%arg0: i32, %arg1: i32, %arg2: memref<8x128xf32, #tpu.memory_space<vmem>>, %arg3: memref<128x128xf32, #tpu.memory_space<vmem>>, %arg4: memref<8x128xf32, #tpu.memory_space<vmem>>) attributes {dimension_semantics = [#tpu.dimension_semantics<parallel>, #tpu.dimension_semantics<parallel>], iteration_bounds = array<i64: 1, 1>, scalar_prefetch = 0 : i64, scratch_operands = 0 : i64, tpu.core_type = #tpu.core_type<tc>, window_params = [{transform_indices = @transform_0, window_bounds = array<i64: 8, 128>}, {transform_indices = @transform_1, window_bounds = array<i64: 128, 128>}, {transform_indices = @transform_2, window_bounds = array<i64: 8, 128>}]} {
    %c0 = arith.constant 0 : index
    %c0_0 = arith.constant 0 : index
    %0 = vector.load %arg2[%c0, %c0_0] : memref<8x128xf32, #tpu.memory_space<vmem>>, vector<8x128xf32>
    %c0_1 = arith.constant 0 : index
    %c0_2 = arith.constant 0 : index
    %1 = vector.load %arg3[%c0_1, %c0_2] : memref<128x128xf32, #tpu.memory_space<vmem>>, vector<128x128xf32>
    %2 = arith.mulf %0, %0 : vector<8x128xf32>
    %cst = arith.constant dense<0.000000e+00> : vector<8xf32>
    %3 = vector.multi_reduction <add>, %2, %cst [1] : vector<8x128xf32> to vector<8xf32>
    %4 = vector.shape_cast %3 : vector<8xf32> to vector<8x1xf32>
    %cst_3 = arith.constant 1.000000e-24 : f32
    %5 = vector.broadcast %cst_3 : f32 to vector<8x1xf32>
    %6 = arith.maximumf %4, %5 : vector<8x1xf32>
    %7 = math.rsqrt %6 : vector<8x1xf32>
    %8 = vector.broadcast %7 : vector<8x1xf32> to vector<8x128xf32>
    %9 = arith.mulf %0, %8 : vector<8x128xf32>
    %10 = arith.mulf %1, %1 : vector<128x128xf32>
    %cst_4 = arith.constant dense<0.000000e+00> : vector<128xf32>
    %11 = vector.multi_reduction <add>, %10, %cst_4 [1] : vector<128x128xf32> to vector<128xf32>
    %12 = vector.shape_cast %11 : vector<128xf32> to vector<128x1xf32>
    %cst_5 = arith.constant 1.000000e-24 : f32
    %13 = vector.broadcast %cst_5 : f32 to vector<128x1xf32>
    %14 = arith.maximumf %12, %13 : vector<128x1xf32>
    %15 = math.rsqrt %14 : vector<128x1xf32>
    %16 = vector.broadcast %15 : vector<128x1xf32> to vector<128x128xf32>
    %17 = arith.mulf %1, %16 : vector<128x128xf32>
    %cst_6 = arith.constant dense<0.000000e+00> : vector<8x128xf32>
    %18 = tpu.matmul %9, %17, %cst_6 {dimension_numbers = #tpu.dot_dimension_numbers<[1], [1], [0], [0], [0, 0, 1, 0], [], []>} : vector<8x128xf32>, vector<128x128xf32>, vector<8x128xf32> -> vector<8x128xf32>
    %cst_7 = arith.constant 2.000000e+00 : f32
    %19 = vector.broadcast %cst_7 : f32 to vector<8x128xf32>
    %20 = arith.mulf %19, %18 : vector<8x128xf32>
    %cst_8 = arith.constant 2.000000e+00 : f32
    %21 = vector.broadcast %cst_8 : f32 to vector<8x128xf32>
    %22 = arith.subf %21, %20 : vector<8x128xf32>
    %cst_9 = arith.constant 0.000000e+00 : f32
    %23 = vector.broadcast %cst_9 : f32 to vector<8x128xf32>
    %24 = arith.maximumf %22, %23 : vector<8x128xf32>
    %25 = math.sqrt %24 : vector<8x128xf32>
    %cst_10 = arith.constant 5.000000e-01 : f32
    %26 = vector.broadcast %cst_10 : f32 to vector<8x128xf32>
    %27 = arith.mulf %26, %25 : vector<8x128xf32>
    %cst_11 = arith.constant 0.000000e+00 : f32
    %cst_12 = arith.constant 1.000000e+00 : f32
    %28 = vector.broadcast %cst_11 : f32 to vector<8x128xf32>
    %29 = arith.maximumf %28, %27 : vector<8x128xf32>
    %30 = vector.broadcast %cst_12 : f32 to vector<8x128xf32>
    %31 = arith.minimumf %30, %29 : vector<8x128xf32>
    %c0_13 = arith.constant 0 : index
    %c0_14 = arith.constant 0 : index
    %32 = vector.load %arg4[%c0_13, %c0_14] : memref<8x128xf32, #tpu.memory_space<vmem>>, vector<8x128xf32>
    tpu.vector_store %arg4[%c0_13, %c0_14], %31 {strides = array<i32>} : memref<8x128xf32, #tpu.memory_space<vmem>>, vector<8x128xf32>,
    return
  }
  func.func @transform_0(%arg0: i32, %arg1: i32) -> (i32, i32) {
    %c0_i32 = arith.constant 0 : i32
    %c0_i32_0 = arith.constant 0 : i32
    return %arg0, %c0_i32 : i32, i32
  }
  func.func @transform_1(%arg0: i32, %arg1: i32) -> (i32, i32) {
    %c0_i32 = arith.constant 0 : i32
    %c0_i32_0 = arith.constant 0 : i32
    return %arg1, %c0_i32 : i32, i32
  }
  func.func @transform_2(%arg0: i32, %arg1: i32) -> (i32, i32) {
    %c0_i32 = arith.constant 0 : i32
    return %arg0, %arg1 : i32, i32
  }
}

</mosaic_0001>

<llo_original>
// kernel: tpu_custom_call.1
$region0: #{tpu_custom_call.1}
  #allocation0 [shape = 'u32[]', space=smem, size = 0x4, offset = 0x4, fixed_abs, tag = 'smem constant byte address 0x4 - core index']
  #allocation1 [shape = 'u32[144,128]{1,0:T(1,128)}', space=vmem, size = 0x12000, scoped, tag = 'internal scratch']
  %s0 = inlined_call_operand.hbm [shape: f32[8,128], index: 0, kind: input, shape index: {}]
  %s1 = inlined_call_operand.hbm [shape: f32[128,128], index: 1, kind: input, shape index: {}]
  %s2 = inlined_call_operand.hbm [shape: f32[8,128], index: 2, kind: output, shape index: {}]
  %s3 = sld [smem:[#allocation0]]
  $region26: #{tpu_custom_call.1} parent=0
    _
  %s5 = ssub.s32 1, %s3
  %s6 = scalar_select 0, %s5, %s3
  $region1: #{tpu_custom_call.1} parent=0
    #allocation2 [shape = 'u8[4096]{0}', space=vmem, size = 0x1000, scoped, tag = 'input window, operand 0, single buffered']
    #allocation3 [shape = 's32[1]{0}', space=sflag, size = 0x4, scoped, tag = 'scoped memory for tpu_custom_call.1']
    #allocation4 [shape = 's32[1]{0}', space=sflag, size = 0x4, scoped, tag = 'scoped memory for tpu_custom_call.1']
    #allocation5 [shape = 'u8[65536]{0}', space=vmem, size = 0x10000, scoped, tag = 'input window, operand 1, single buffered']
    #allocation6 [shape = 's32[1]{0}', space=sflag, size = 0x4, scoped, tag = 'scoped memory for tpu_custom_call.1']
    #allocation7 [shape = 'u8[4096]{0}', space=vmem, size = 0x1000, scoped, tag = 'output window, operand 0, single buffered']
    %7 = vsyncpa [#allocation3], 0
    %8 = vsyncpa [#allocation6], 0
    %9 = vsyncpa [#allocation4], 0
    // Predicated region
    $region2: #{tpu_custom_call.1} parent=1 // pred_check
      _
    $region3: #{tpu_custom_call.1} parent=1 // pred_check_branch
      %11 = sbr.rel (0) target = $region5
    $region4: #{tpu_custom_call.1} parent=1 // pred_region
      %s13 = ssub.s32 128, 128
      %14 = vsyncadd [#allocation3], %s13
      %s16 = sshll.u32 [#allocation2], 4
      %s17 = int_to_ptr.vmem [resolvable:$true] %s16
      %19 = dma.hbm_to_vmem [thread:$0]  %s0, 128, %s17, [#allocation3]
    $region5: #{tpu_custom_call.1} parent=1 // pred_fallthru
      _
    // Predicated region
    $region6: #{tpu_custom_call.1} parent=1 // pred_check
      _
    $region7: #{tpu_custom_call.1} parent=1 // pred_check_branch
      %21 = sbr.rel (0) target = $region9
    $region8: #{tpu_custom_call.1} parent=1 // pred_region
      %s23 = ssub.s32 2048, 2048
      %24 = vsyncadd [#allocation6], %s23
      %s25 = sshll.u32 [#allocation5], 4
      %s26 = int_to_ptr.vmem [resolvable:$true] %s25
      %31 = dma.hbm_to_vmem [thread:$0]  %s1, 2048, %s26, [#allocation6], 128, 128, 8
    $region9: #{tpu_custom_call.1} parent=1 // pred_fallthru
      _
    // Predicated region
    $region10: #{tpu_custom_call.1} parent=1 // pred_check
      _
    $region11: #{tpu_custom_call.1} parent=1 // pred_check_branch
      %33 = sbr.rel (0) target = $region13
    $region12: #{tpu_custom_call.1} parent=1 // pred_region
      %34 = dma.done [#allocation3], 128
    $region13: #{tpu_custom_call.1} parent=1 // pred_fallthru
      _
    // Predicated region
    $region14: #{tpu_custom_call.1} parent=1 // pred_check
      _
    $region15: #{tpu_custom_call.1} parent=1 // pred_check_branch
      %36 = sbr.rel (0) target = $region17
    $region16: #{tpu_custom_call.1} parent=1 // pred_region
      %37 = dma.done [#allocation6], 2048
    $region17: #{tpu_custom_call.1} parent=1 // pred_fallthru
      _
    %v38 = vld [vmem:[#allocation2] sm:$0xff]
    %v39 = vld [vmem:[#allocation5] sm:$0xff]
    %v40 = vld [vmem:[#allocation5 + $0x8] sm:$0xff]
    %v41 = vld [vmem:[#allocation5 + $0x10] sm:$0xff]
    %v42 = vld [vmem:[#allocation5 + $0x18] sm:$0xff]
    %v43 = vld [vmem:[#allocation5 + $0x20] sm:$0xff]
    %v44 = vld [vmem:[#allocation5 + $0x28] sm:$0xff]
    %v45 = vld [vmem:[#allocation5 + $0x30] sm:$0xff]
    %v46 = vld [vmem:[#allocation5 + $0x38] sm:$0xff]
    %v47 = vld [vmem:[#allocation5 + $0x40] sm:$0xff]
    %v48 = vld [vmem:[#allocation5 + $0x48] sm:$0xff]
    %v49 = vld [vmem:[#allocation5 + $0x50] sm:$0xff]
    %v50 = vld [vmem:[#allocation5 + $0x58] sm:$0xff]
    %v51 = vld [vmem:[#allocation5 + $0x60] sm:$0xff]
    %v52 = vld [vmem:[#allocation5 + $0x68] sm:$0xff]
    %v53 = vld [vmem:[#allocation5 + $0x70] sm:$0xff]
    %v54 = vld [vmem:[#allocation5 + $0x78] sm:$0xff]
    %v55 = vmul.f32 %v38, %v38
    %56 = vadd.xlane.f32.xlu0 %v55
    %v57 = vpop.xlane.xlu0 %56
    %v58 = vmax.f32 %v57, 1e-24
    %v59 = vrsqrt.pop %v58
    %v60 = vmul.f32 %v38, %v59
    %v61 = vmul.f32 %v39, %v39
    %v62 = vmul.f32 %v40, %v40
    %v63 = vmul.f32 %v41, %v41
    %v64 = vmul.f32 %v42, %v42
    %v65 = vmul.f32 %v43, %v43
    %v66 = vmul.f32 %v44, %v44
    %v67 = vmul.f32 %v45, %v45
    %v68 = vmul.f32 %v46, %v46
    %v69 = vmul.f32 %v47, %v47
    %v70 = vmul.f32 %v48, %v48
    %v71 = vmul.f32 %v49, %v49
    %v72 = vmul.f32 %v50, %v50
    %v73 = vmul.f32 %v51, %v51
    %v74 = vmul.f32 %v52, %v52
    %v75 = vmul.f32 %v53, %v53
    %v76 = vmul.f32 %v54, %v54
    %77 = vadd.xlane.f32.xlu0 %v61
    %v78 = vpop.xlane.xlu0 %77
    %79 = vadd.xlane.f32.xlu0 %v62
    %v80 = vpop.xlane.xlu0 %79
    %81 = vadd.xlane.f32.xlu0 %v63
    %v82 = vpop.xlane.xlu0 %81
    %83 = vadd.xlane.f32.xlu0 %v64
    %v84 = vpop.xlane.xlu0 %83
    %85 = vadd.xlane.f32.xlu0 %v65
    %v86 = vpop.xlane.xlu0 %85
    %87 = vadd.xlane.f32.xlu0 %v66
    %v88 = vpop.xlane.xlu0 %87
    %89 = vadd.xlane.f32.xlu0 %v67
    %v90 = vpop.xlane.xlu0 %89
    %91 = vadd.xlane.f32.xlu0 %v68
    %v92 = vpop.xlane.xlu0 %91
    %93 = vadd.xlane.f32.xlu0 %v69
    %v94 = vpop.xlane.xlu0 %93
    %95 = vadd.xlane.f32.xlu0 %v70
    %v96 = vpop.xlane.xlu0 %95
    %97 = vadd.xlane.f32.xlu0 %v71
    %v98 = vpop.xlane.xlu0 %97
    %99 = vadd.xlane.f32.xlu0 %v72
    %v100 = vpop.xlane.xlu0 %99
    %101 = vadd.xlane.f32.xlu0 %v73
    %v102 = vpop.xlane.xlu0 %101
    %103 = vadd.xlane.f32.xlu0 %v74
    %v104 = vpop.xlane.xlu0 %103
    %105 = vadd.xlane.f32.xlu0 %v75
    %v106 = vpop.xlane.xlu0 %105
    %107 = vadd.xlane.f32.xlu0 %v76
    %v108 = vpop.xlane.xlu0 %107
    %v109 = vmax.f32 %v78, 1e-24
    %v110 = vmax.f32 %v80, 1e-24
    %v111 = vmax.f32 %v82, 1e-24
    %v112 = vmax.f32 %v84, 1e-24
    %v113 = vmax.f32 %v86, 1e-24
    %v114 = vmax.f32 %v88, 1e-24
    %v115 = vmax.f32 %v90, 1e-24
    %v116 = vmax.f32 %v92, 1e-24
    %v117 = vmax.f32 %v94, 1e-24
    %v118 = vmax.f32 %v96, 1e-24
    %v119 = vmax.f32 %v98, 1e-24
    %v120 = vmax.f32 %v100, 1e-24
    %v121 = vmax.f32 %v102, 1e-24
    %v122 = vmax.f32 %v104, 1e-24
    %v123 = vmax.f32 %v106, 1e-24
    %v124 = vmax.f32 %v108, 1e-24
    %v125 = vrsqrt.pop %v109
    %v126 = vrsqrt.pop %v110
    %v127 = vrsqrt.pop %v111
    %v128 = vrsqrt.pop %v112
    %v129 = vrsqrt.pop %v113
    %v130 = vrsqrt.pop %v114
    %v131 = vrsqrt.pop %v115
    %v132 = vrsqrt.pop %v116
    %v133 = vrsqrt.pop %v117
    %v134 = vrsqrt.pop %v118
    %v135 = vrsqrt.pop %v119
    %v136 = vrsqrt.pop %v120
    %v137 = vrsqrt.pop %v121
    %v138 = vrsqrt.pop %v122
    %v139 = vrsqrt.pop %v123
    %v140 = vrsqrt.pop %v124
    %v141 = vmul.f32 %v39, %v125
    %v142 = vmul.f32 %v40, %v126
    %v143 = vmul.f32 %v41, %v127
    %v144 = vmul.f32 %v42, %v128
    %v145 = vmul.f32 %v43, %v129
    %v146 = vmul.f32 %v44, %v130
    %v147 = vmul.f32 %v45, %v131
    %v148 = vmul.f32 %v46, %v132
    %v149 = vmul.f32 %v47, %v133
    %v150 = vmul.f32 %v48, %v134
    %v151 = vmul.f32 %v49, %v135
    %v152 = vmul.f32 %v50, %v136
    %v153 = vmul.f32 %v51, %v137
    %v154 = vmul.f32 %v52, %v138
    %v155 = vmul.f32 %v53, %v139
    %v156 = vmul.f32 %v54, %v140
    %157 = vmatprep.subr.mxu0 0.0
    %158 = vmatpush1.xpose.msra.mxu0 %v156
    %159 = vmatprep.subr.mxu0 0.0
    %160 = vmatpush1.xpose.msra.mxu0 %v155
    %161 = vmatprep.subr.mxu0 0.0
    %162 = vmatpush1.xpose.msra.mxu0 %v154
    %163 = vmatprep.subr.mxu0 0.0
    %164 = vmatpush1.xpose.msra.mxu0 %v153
    %165 = vmatprep.subr.mxu0 0.0
    %166 = vmatpush1.xpose.msra.mxu0 %v152
    %167 = vmatprep.subr.mxu0 0.0
    %168 = vmatpush1.xpose.msra.mxu0 %v151
    %169 = vmatprep.subr.mxu0 0.0
    %170 = vmatpush1.xpose.msra.mxu0 %v150
    %171 = vmatprep.subr.mxu0 0.0
    %172 = vmatpush1.xpose.msra.mxu0 %v149
    %173 = vmatprep.subr.mxu0 0.0
    %174 = vmatpush1.xpose.msra.mxu0 %v148
    %175 = vmatprep.subr.mxu0 0.0
    %176 = vmatpush1.xpose.msra.mxu0 %v147
    %177 = vmatprep.subr.mxu0 0.0
    %178 = vmatpush1.xpose.msra.mxu0 %v146
    %179 = vmatprep.subr.mxu0 0.0
    %180 = vmatpush1.xpose.msra.mxu0 %v145
    %181 = vmatprep.subr.mxu0 0.0
    %182 = vmatpush1.xpose.msra.mxu0 %v144
    %183 = vmatprep.subr.mxu0 0.0
    %184 = vmatpush1.xpose.msra.mxu0 %v143
    %185 = vmatprep.subr.mxu0 0.0
    %186 = vmatpush1.xpose.msra.mxu0 %v142
    %187 = vmatprep.subr.mxu0 0.0
    %188 = vmatpush1.xpose.msra.mxu0 %v141
    %189 = vmatprep.subr.mxu0 0.0
    %190 = vmatpush2.xpose.msra.mxu0 0.0
    %191 = vmatprep.subr.mxu0 0.0
    %192 = vmatpush2.xpose.msra.mxu0 0.0
    %193 = vmatprep.subr.mxu0 0.0
    %194 = vmatpush2.xpose.msra.mxu0 0.0
    %195 = vmatprep.subr.mxu0 0.0
    %196 = vmatpush2.xpose.msra.mxu0 0.0
    %197 = vmatprep.subr.mxu0 0.0
    %198 = vmatpush2.xpose.msra.mxu0 0.0
    %199 = vmatprep.subr.mxu0 0.0
    %200 = vmatpush2.xpose.msra.mxu0 0.0
    %201 = vmatprep.subr.mxu0 0.0
    %202 = vmatpush2.xpose.msra.mxu0 0.0
    %203 = vmatprep.subr.mxu0 0.0
    %204 = vmatpush2.xpose.msra.mxu0 0.0
    %205 = vmatprep.subr.mxu0 0.0
    %206 = vmatpush2.xpose.msra.mxu0 0.0
    %207 = vmatprep.subr.mxu0 0.0
    %208 = vmatpush2.xpose.msra.mxu0 0.0
    %209 = vmatprep.subr.mxu0 0.0
    %210 = vmatpush2.xpose.msra.mxu0 0.0
    %211 = vmatprep.subr.mxu0 0.0
    %212 = vmatpush2.xpose.msra.mxu0 0.0
    %213 = vmatprep.subr.mxu0 0.0
    %214 = vmatpush2.xpose.msra.mxu0 0.0
    %215 = vmatprep.subr.mxu0 0.0
    %216 = vmatpush2.xpose.msra.mxu0 0.0
    %217 = vmatprep.subr.mxu0 0.0
    %218 = vmatpush2.xpose.msra.mxu0 0.0
    %219 = vmatprep.subr.mxu0 0.0
    %220 = vmatpush2.xpose.msra.mxu0 0.0
    %221 = vmatprep.mubr.f32.mxu0 0.0
    %222 = vmatmul.mubr.f32.gmra.mxu0 %v60
    %v223 = vpop.f32.mrf.mxu0
    %v224 = vadd.f32 0.0, %v223
    %v225 = vpop.f32.mrf.mxu0
    %226 = vdwg.mxu0
    %v227 = vmul.f32 %v224, 2.0
    %v228 = vsub.f32 2.0, %v227
    %v229 = vmax.f32 %v228, 0.0
    %v230 = vrsqrt.pop %v229
    %v231 = vmul.f32 %v229, %v230
    %vm232 = vcmp.eq.f32.partialorder %v229, inf
    %v233 = vsel %vm232, %v229, %v231
    %vm234 = vcmp.eq.f32.partialorder %v229, 0.0
    %v235 = vand.u32 %v229, 2147483648
    %v236 = vsel %vm234, %v235, %v233
    %v237 = vmul.f32 %v236, 0.5
    %v238 = vmax.f32 %v237, 0.0
    %v239 = vmin.f32 %v238, 1.0
    %240 = vst [vmem:[#allocation7] sm:$0xff] %v239
    // Predicated region
    $region18: #{tpu_custom_call.1} parent=1 // pred_check
      _
    $region19: #{tpu_custom_call.1} parent=1 // pred_check_branch
      %242 = sbr.rel (0) target = $region21
    $region20: #{tpu_custom_call.1} parent=1 // pred_region
      %s244 = ssub.s32 128, 128
      %245 = vsyncadd [#allocation4], %s244
      %s247 = sshll.u32 [#allocation7], 4
      %s248 = int_to_ptr.vmem [resolvable:$true] %s247
      %250 = dma.vmem_to_hbm [thread:$0]  %s248, 128, %s2, [#allocation4]
    $region21: #{tpu_custom_call.1} parent=1 // pred_fallthru
      _
    // Predicated region
    $region22: #{tpu_custom_call.1} parent=1 // pred_check
      _
    $region23: #{tpu_custom_call.1} parent=1 // pred_check_branch
      %252 = sbr.rel (0) target = $region25
    $region24: #{tpu_custom_call.1} parent=1 // pred_region
      %253 = dma.done [#allocation4], 128
    $region25: #{tpu_custom_call.1} parent=1 // pred_fallthru
      _
    %254 = vsyncpa [#allocation3], 1
    %255 = vsyncpa [#allocation6], 1
    %256 = vsyncpa [#allocation4], 1

</llo_original>
